<compile_context>
chip_gen: v5e
topology: v5e:2x2
jax: 0.10.0
libtpu: 0.0.40
codegen_flags: <defaults>
</compile_context>

<pallas_src>
import jax
import jax.numpy as jnp
from jax.experimental import pallas as pl
from jax.experimental.pallas import tpu as pltpu


def _round_up(x, m):
    return ((x + m - 1) // m) * m


def _cdiv(a, b):
    return -(-a // b)


def _tpu_vmem_capacity_bytes():
    """Physical VMEM per TensorCore (64 MiB on v7x, 128 MiB on v5e/v6e)."""
    try:
        return int(pltpu.get_tpu_info().vmem_capacity_bytes)
    except Exception:
        return 128 << 20


def _pick_tile_n(inter_dim, tile_n=256):
    """Chunk width over inter_dim: a multiple of 128 (so the W1/W3 split in the
    kernel is a free view) chosen to minimize padding, capped near tile_n."""
    tile_n = max(128, _round_up(tile_n, 128))
    if inter_dim <= 128:
        return 128
    best = None
    nc_lo = _cdiv(inter_dim, tile_n)
    nc_hi = max(nc_lo, _cdiv(inter_dim, 128))
    for nc in range(nc_lo, nc_hi + 1):
        tn = _round_up(_cdiv(inter_dim, nc), 128)
        pad = nc * tn - inter_dim
        key = (pad, nc)
        if best is None or key < best[0]:
            best = (key, tn)
        if pad == 0:
            break
    return best[1]


def prepare_expert_weights(params, *, tile_n=256, compute_dtype=jnp.bfloat16):
    """Hoisted weight preprocessing. Call ONCE per expert (at load time) and
    cache/reuse the returned dict across forward calls."""
    cdt = jnp.dtype(compute_dtype)
    w1 = jnp.asarray(params["w1_w"])      # [inter, dim]  (torch Linear layout)
    w2 = jnp.asarray(params["w2_w"])      # [dim, inter]
    w3 = jnp.asarray(params["w3_w"])      # [inter, dim]
    inter_dim, dim = w1.shape

    tn = _pick_tile_n(inter_dim, tile_n)
    nc = _cdiv(inter_dim, tn)
    inter_pad = nc * tn

    w1_t = w1.T.astype(cdt)               # [dim, inter]
    w3_t = w3.T.astype(cdt)               # [dim, inter]
    w2_t = w2.T.astype(cdt)               # [inter, dim]
    b1 = jnp.asarray(params["w1_b"]).astype(jnp.float32)
    b3 = jnp.asarray(params["w3_b"]).astype(jnp.float32)
    b2 = jnp.asarray(params["w2_b"]).astype(jnp.float32).reshape(1, dim)

    if inter_pad != inter_dim:
        p = inter_pad - inter_dim
        # Zero padding is exact: padded h1 = h3 = 0 and padded W2 rows are 0.
        w1_t = jnp.pad(w1_t, ((0, 0), (0, p)))
        w3_t = jnp.pad(w3_t, ((0, 0), (0, p)))
        w2_t = jnp.pad(w2_t, ((0, p), (0, 0)))
        b1 = jnp.pad(b1, (0, p))
        b3 = jnp.pad(b3, (0, p))

    # Fused W1|W3, chunk-major [nc, dim, 2*tn] -> one contiguous DMA per chunk.
    w13 = jnp.concatenate(
        [w1_t.reshape(dim, nc, tn), w3_t.reshape(dim, nc, tn)], axis=2)
    w13 = jnp.transpose(w13, (1, 0, 2))                               # [nc, dim, 2*tn]
    b13 = jnp.concatenate(
        [b1.reshape(nc, 1, tn), b3.reshape(nc, 1, tn)], axis=2)       # [nc, 1, 2*tn]

    return {
        "w13": w13, "b13": b13, "w2": w2_t, "b2": b2,
        "dim": dim, "inter_dim": inter_dim, "tn": tn,
    }


def expert_kernel(x_ref, w13_ref, b13_ref, w2_ref, b2_ref, o_ref, acc_ref):
    """One (token-tile i, inter_dim-chunk j) step. j (grid axis 1) is a
    reduction over inter_dim chunks accumulated into the f32 scratch."""
    j = pl.program_id(1)

    @pl.when(j == 0)
    def _init():
        acc_ref[...] = jnp.zeros_like(acc_ref)

    # True-f32 MXU path for the f32 reference config; default (single-pass
    # bf16) otherwise.
    prec = (jax.lax.Precision.HIGHEST
            if x_ref.dtype == jnp.float32 else None)

    # Fused up-projection: one matmul covers this chunk of both W1 and W3.
    h13 = jnp.dot(x_ref[...], w13_ref[...],
                  preferred_element_type=jnp.float32,
                  precision=prec) + b13_ref[...]
    tn = h13.shape[-1] // 2
    h1 = h13[:, :tn]          # tn is a multiple of 128 -> split is a free view
    h3 = h13[:, tn:]

    # SiLU gate in f32 (sigmoid goes to the EUP slot); cast sits right next to
    # the down-projection matmul.
    h = (h1 * jax.nn.sigmoid(h1)) * h3

    acc_ref[...] += jnp.dot(h.astype(w2_ref.dtype), w2_ref[...],
                            preferred_element_type=jnp.float32,
                            precision=prec)

    @pl.when(j == pl.num_programs(1) - 1)
    def _finalize():
        o_ref[...] = (acc_ref[...] + b2_ref[...]).astype(o_ref.dtype)


def expert_forward(x, prepared, *, tile_m=None, out_dtype=None):
    """x: [..., dim]. `prepared` comes from prepare_expert_weights()."""
    dim = prepared["dim"]
    tn = prepared["tn"]
    w13, b13 = prepared["w13"], prepared["b13"]
    w2, b2 = prepared["w2"], prepared["b2"]
    nc = w13.shape[0]
    inter_pad = nc * tn
    cdt = w13.dtype
    csz = jnp.dtype(cdt).itemsize

    orig_shape = x.shape
    assert orig_shape[-1] == dim, "trailing dim of x must equal expert dim"
    x2 = x.reshape(-1, dim)
    n = x2.shape[0]

    out_dtype = jnp.dtype(out_dtype) if out_dtype is not None else x.dtype
    osz = jnp.dtype(out_dtype).itemsize

    vmem_cap = _tpu_vmem_capacity_bytes()

    # ---- token-tile size: largest fitting ~72% of VMEM with double buffering.
    if tile_m is None:
        budget = int(0.72 * vmem_cap)
        fixed = 2 * (dim * 2 * tn * csz        # W13 chunk (double-buffered)
                     + 2 * tn * 4              # b13 chunk
                     + tn * dim * csz          # W2 chunk
                     + dim * 4)                # b2
        per_tm = (2 * dim * csz                # x tile (double-buffered)
                  + 2 * dim * osz              # out tile (double-buffered)
                  + dim * 4                    # f32 accumulator
                  + 6 * 2 * tn * 4)            # h13 / gate intermediates headroom
        tm_cap = (budget - fixed) // max(per_tm, 1)
        tm_cap = max(128, (min(768, int(tm_cap)) // 128) * 128)
    else:
        tm_cap = tile_m

    tm = min(tm_cap, _round_up(n, 16))
    # Ensure the 'parallel' token axis has >= 2 steps when possible so both
    # TensorCores (v7x megacore) get work.
    if n >= 32 and _round_up(n, tm) // tm < 2:
        tm = _round_up(_cdiv(n, 2), 16)
    n_pad = _round_up(n, tm)

    x_c = x2.astype(cdt)
    if n_pad != n:
        x_c = jnp.pad(x_c, ((0, n_pad - n), (0, 0)))

    grid = (n_pad // tm, nc)

    in_specs = [
        pl.BlockSpec((tm, dim), lambda i, j: (i, 0)),                 # x row tile
        pl.BlockSpec((None, dim, 2 * tn), lambda i, j: (j, 0, 0)),    # fused W1|W3 chunk
        pl.BlockSpec((None, 1, 2 * tn), lambda i, j: (j, 0, 0)),      # fused b1|b3 chunk
        pl.BlockSpec((tn, dim), lambda i, j: (j, 0)),                 # W2 chunk
        pl.BlockSpec((1, dim), lambda i, j: (0, 0)),                  # b2
    ]
    out_spec = pl.BlockSpec((tm, dim), lambda i, j: (i, 0))

    # Scoped-VMEM budget for this tiling, capped below physical VMEM.
    ws = (2 * (tm * dim * csz + dim * 2 * tn * csz + 2 * tn * 4
               + tn * dim * csz + dim * 4 + tm * dim * osz)
          + tm * dim * 4 + 6 * tm * 2 * tn * 4)
    vmem_limit = int(min(max(ws + (2 << 20), 16 << 20), int(0.9 * vmem_cap)))

    # Weights are re-streamed once per token tile (reduction axis is innermost).
    n_row_tiles = n_pad // tm
    weight_bytes = w13.size * csz + w2.size * csz + b13.size * 4 + b2.size * 4
    cost = pl.CostEstimate(
        flops=6 * n_pad * dim * inter_pad,
        transcendentals=n_pad * inter_pad,
        bytes_accessed=int(x_c.size * csz + n_pad * dim * osz
                           + n_row_tiles * weight_bytes),
    )

    out = pl.pallas_call(
        expert_kernel,
        out_shape=jax.ShapeDtypeStruct((n_pad, dim), out_dtype),
        grid_spec=pltpu.PrefetchScalarGridSpec(
            num_scalar_prefetch=0,
            grid=grid,
            in_specs=in_specs,
            out_specs=out_spec,
            scratch_shapes=[pltpu.VMEM((tm, dim), jnp.float32)],
        ),
        compiler_params=pltpu.CompilerParams(
            dimension_semantics=("parallel", "arbitrary"),
            vmem_limit_bytes=vmem_limit,
        ),
        cost_estimate=cost,
    )(x_c, w13, b13, w2, b2)

    return out[:n].reshape(orig_shape)


def expert_forward_from_params(x, params, *, tile_n=256, tile_m=None,
                               compute_dtype=jnp.bfloat16, out_dtype=None):
    """Convenience wrapper. In production, hoist prepare_expert_weights() to
    parameter-load time and reuse the prepared dict across calls."""
    prepared = prepare_expert_weights(params, tile_n=tile_n,
                                      compute_dtype=compute_dtype)
    return expert_forward(x, prepared, tile_m=tile_m, out_dtype=out_dtype)


def init_expert_params(key, dim, inter_dim):
    """Deterministic init mimicking torch.nn.Linear (weight [out, in], bias [out])."""
    k1, k2, k3, k4, k5, k6 = jax.random.split(key, 6)
    s1 = 1.0 / jnp.sqrt(dim)
    s2 = 1.0 / jnp.sqrt(inter_dim)
    return {
        "w1_w": jax.random.uniform(k1, (inter_dim, dim), jnp.float32, -s1, s1),
        "w1_b": jax.random.uniform(k2, (inter_dim,), jnp.float32, -s1, s1),
        "w2_w": jax.random.uniform(k3, (dim, inter_dim), jnp.float32, -s2, s2),
        "w2_b": jax.random.uniform(k4, (dim,), jnp.float32, -s2, s2),
        "w3_w": jax.random.uniform(k5, (inter_dim, dim), jnp.float32, -s1, s1),
        "w3_b": jax.random.uniform(k6, (inter_dim,), jnp.float32, -s1, s1),
    }


def expert_reference(x, p):
    h1 = x @ p["w1_w"].T + p["w1_b"]
    h3 = x @ p["w3_w"].T + p["w3_b"]
    h = jax.nn.silu(h1) * h3
    return h @ p["w2_w"].T + p["w2_b"]


if __name__ == "__main__":
    key = jax.random.PRNGKey(0)
    kx, kp = jax.random.split(key)

    batch, seq, dim, inter_dim = 2, 8, 32, 64
    x = jax.random.normal(kx, (batch, seq, dim), jnp.float32)
    params = init_expert_params(kp, dim, inter_dim)

    ref = expert_reference(x.reshape(-1, dim), params).reshape(batch, seq, dim)

    # f32 compute path (Precision.HIGHEST in-kernel): tight check vs reference.
    prep_f32 = prepare_expert_weights(params, compute_dtype=jnp.float32)
    out_f32 = jax.block_until_ready(expert_forward(x, prep_f32))
    assert out_f32.shape == (batch, seq, dim)
    assert jnp.allclose(out_f32, ref, atol=1e-4, rtol=1e-4), "f32 mismatch vs reference"

    # bf16 compute path (production config, weights prepared once): looser tol.
    prep_bf16 = prepare_expert_weights(params, compute_dtype=jnp.bfloat16)
    out_bf16 = jax.block_until_ready(expert_forward(x, prep_bf16, out_dtype=jnp.float32))
    assert out_bf16.shape == (batch, seq, dim)
    assert jnp.allclose(out_bf16, ref, atol=5e-2, rtol=5e-2), "bf16 mismatch vs reference"

    print("KERNEL_OK")
</pallas_src>

<mosaic_0001>
module attributes {stable_mosaic.version = 11 : i64} {
  func.func @expert_kernel(%arg0: i32, %arg1: i32, %arg2: memref<16x32xf32, #tpu.memory_space<vmem>>, %arg3: memref<1x32x256xf32, #tpu.memory_space<vmem>>, %arg4: memref<1x1x256xf32, #tpu.memory_space<vmem>>, %arg5: memref<128x32xf32, #tpu.memory_space<vmem>>, %arg6: memref<1x32xf32, #tpu.memory_space<vmem>>, %arg7: memref<16x32xf32, #tpu.memory_space<vmem>>, %arg8: memref<16x32xf32, #tpu.memory_space<vmem>>) attributes {dimension_semantics = [#tpu.dimension_semantics<parallel>, #tpu.dimension_semantics<arbitrary>], iteration_bounds = array<i64: 1, 1>, scalar_prefetch = 0 : i64, scratch_operands = 1 : i64, tpu.core_type = #tpu.core_type<tc>, window_params = [{transform_indices = @transform_0, window_bounds = array<i64: 16, 32>}, {transform_indices = @transform_1, window_bounds = array<i64: 1, 32, 256>}, {transform_indices = @transform_2, window_bounds = array<i64: 1, 1, 256>}, {transform_indices = @transform_3, window_bounds = array<i64: 128, 32>}, {pipeline_mode = #tpu.pipeline_mode<synchronous>, transform_indices = @transform_4, window_bounds = array<i64: 1, 32>}, {transform_indices = @transform_5, window_bounds = array<i64: 16, 32>}]} {
    %c0_i32 = arith.constant 0 : i32
    %0 = arith.cmpi eq, %arg1, %c0_i32 : i32
    %1 = arith.extui %0 : i1 to i32
    %c0_i32_0 = arith.constant 0 : i32
    %2 = arith.cmpi ne, %1, %c0_i32_0 : i32
    scf.if %2 {
      %cst_18 = arith.constant 0.000000e+00 : f32
      %28 = vector.broadcast %cst_18 : f32 to vector<16x32xf32>
      %c0_19 = arith.constant 0 : index
      %c0_20 = arith.constant 0 : index
      %29 = vector.load %arg8[%c0_19, %c0_20] : memref<16x32xf32, #tpu.memory_space<vmem>>, vector<16x32xf32>
      tpu.vector_store %arg8[%c0_19, %c0_20], %28 {strides = array<i32>} : memref<16x32xf32, #tpu.memory_space<vmem>>, vector<16x32xf32>,
    } else {
    }
    %c0 = arith.constant 0 : index
    %c0_1 = arith.constant 0 : index
    %3 = vector.load %arg2[%c0, %c0_1] : memref<16x32xf32, #tpu.memory_space<vmem>>, vector<16x32xf32>
    %c0_2 = arith.constant 0 : index
    %c0_3 = arith.constant 0 : index
    %c0_4 = arith.constant 0 : index
    %4 = vector.load %arg3[%c0_2, %c0_3, %c0_4] : memref<1x32x256xf32, #tpu.memory_space<vmem>>, vector<1x32x256xf32>
    %5 = vector.shape_cast %4 : vector<1x32x256xf32> to vector<32x256xf32>
    %cst = arith.constant dense<0.000000e+00> : vector<16x256xf32>
    %6 = tpu.matmul %3, %5, %cst {dimension_numbers = #tpu.dot_dimension_numbers<[1], [0], [0], [1], [0, 0, 1, 1], [], []>, precision = #tpu.contract_precision<fp32>} : vector<16x32xf32>, vector<32x256xf32>, vector<16x256xf32> -> vector<16x256xf32>
    %c0_5 = arith.constant 0 : index
    %c0_6 = arith.constant 0 : index
    %c0_7 = arith.constant 0 : index
    %7 = vector.load %arg4[%c0_5, %c0_6, %c0_7] : memref<1x1x256xf32, #tpu.memory_space<vmem>>, vector<1x1x256xf32>
    %8 = vector.shape_cast %7 : vector<1x1x256xf32> to vector<1x256xf32>
    %9 = vector.broadcast %8 : vector<1x256xf32> to vector<16x256xf32>
    %10 = arith.addf %6, %9 : vector<16x256xf32>
    %11 = vector.extract_strided_slice %10 {offsets = [0, 0], sizes = [16, 128], strides = [1, 1]} : vector<16x256xf32> to vector<16x128xf32>
    %12 = vector.extract_strided_slice %10 {offsets = [0, 128], sizes = [16, 128], strides = [1, 1]} : vector<16x256xf32> to vector<16x128xf32>
    %13 = arith.negf %11 : vector<16x128xf32>
    %14 = math.exp %13 : vector<16x128xf32>
    %cst_8 = arith.constant 1.000000e+00 : f32
    %15 = vector.broadcast %cst_8 : f32 to vector<16x128xf32>
    %16 = arith.addf %15, %14 : vector<16x128xf32>
    %17 = arith.divf %15, %16 : vector<16x128xf32>
    %18 = arith.mulf %11, %17 : vector<16x128xf32>
    %19 = arith.mulf %18, %12 : vector<16x128xf32>
    %c0_9 = arith.constant 0 : index
    %c0_10 = arith.constant 0 : index
    %20 = vector.load %arg8[%c0_9, %c0_10] : memref<16x32xf32, #tpu.memory_space<vmem>>, vector<16x32xf32>
    %c0_11 = arith.constant 0 : index
    %c0_12 = arith.constant 0 : index
    %21 = vector.load %arg5[%c0_11, %c0_12] : memref<128x32xf32, #tpu.memory_space<vmem>>, vector<128x32xf32>
    %cst_13 = arith.constant dense<0.000000e+00> : vector<16x32xf32>
    %22 = tpu.matmul %19, %21, %cst_13 {dimension_numbers = #tpu.dot_dimension_numbers<[1], [0], [0], [1], [0, 0, 1, 1], [], []>, precision = #tpu.contract_precision<fp32>} : vector<16x128xf32>, vector<128x32xf32>, vector<16x32xf32> -> vector<16x32xf32>
    %23 = arith.addf %20, %22 : vector<16x32xf32>
    %c0_14 = arith.constant 0 : index
    %c0_15 = arith.constant 0 : index
    %24 = vector.load %arg8[%c0_14, %c0_15] : memref<16x32xf32, #tpu.memory_space<vmem>>, vector<16x32xf32>
    tpu.vector_store %arg8[%c0_14, %c0_15], %23 {strides = array<i32>} : memref<16x32xf32, #tpu.memory_space<vmem>>, vector<16x32xf32>,
    %c0_i32_16 = arith.constant 0 : i32
    %25 = arith.cmpi eq, %arg1, %c0_i32_16 : i32
    %26 = arith.extui %25 : i1 to i32
    %c0_i32_17 = arith.constant 0 : i32
    %27 = arith.cmpi ne, %26, %c0_i32_17 : i32
    scf.if %27 {
      %c0_18 = arith.constant 0 : index
      %c0_19 = arith.constant 0 : index
      %28 = vector.load %arg8[%c0_18, %c0_19] : memref<16x32xf32, #tpu.memory_space<vmem>>, vector<16x32xf32>
      %c0_20 = arith.constant 0 : index
      %c0_21 = arith.constant 0 : index
      %29 = vector.load %arg6[%c0_20, %c0_21] : memref<1x32xf32, #tpu.memory_space<vmem>>, vector<1x32xf32>
      %30 = vector.broadcast %29 : vector<1x32xf32> to vector<16x32xf32>
      %31 = arith.addf %28, %30 : vector<16x32xf32>
      %c0_22 = arith.constant 0 : index
      %c0_23 = arith.constant 0 : index
      %32 = vector.load %arg7[%c0_22, %c0_23] : memref<16x32xf32, #tpu.memory_space<vmem>>, vector<16x32xf32>
      tpu.vector_store %arg7[%c0_22, %c0_23], %31 {strides = array<i32>} : memref<16x32xf32, #tpu.memory_space<vmem>>, vector<16x32xf32>,
    } else {
    }
    return
  }
  func.func @transform_0(%arg0: i32, %arg1: i32) -> (i32, i32) {
    %c0_i32 = arith.constant 0 : i32
    %c0_i32_0 = arith.constant 0 : i32
    return %arg0, %c0_i32 : i32, i32
  }
  func.func @transform_1(%arg0: i32, %arg1: i32) -> (i32, i32, i32) {
    %c0_i32 = arith.constant 0 : i32
    %c0_i32_0 = arith.constant 0 : i32
    %c0_i32_1 = arith.constant 0 : i32
    return %arg1, %c0_i32, %c0_i32_0 : i32, i32, i32
  }
  func.func @transform_2(%arg0: i32, %arg1: i32) -> (i32, i32, i32) {
    %c0_i32 = arith.constant 0 : i32
    %c0_i32_0 = arith.constant 0 : i32
    %c0_i32_1 = arith.constant 0 : i32
    return %arg1, %c0_i32, %c0_i32_0 : i32, i32, i32
  }
  func.func @transform_3(%arg0: i32, %arg1: i32) -> (i32, i32) {
    %c0_i32 = arith.constant 0 : i32
    %c0_i32_0 = arith.constant 0 : i32
    return %arg1, %c0_i32 : i32, i32
  }
  func.func @transform_4(%arg0: i32, %arg1: i32) -> (i32, i32) {
    %c0_i32 = arith.constant 0 : i32
    %c0_i32_0 = arith.constant 0 : i32
    %c0_i32_1 = arith.constant 0 : i32
    return %c0_i32, %c0_i32_0 : i32, i32
  }
  func.func @transform_5(%arg0: i32, %arg1: i32) -> (i32, i32) {
    %c0_i32 = arith.constant 0 : i32
    %c0_i32_0 = arith.constant 0 : i32
    return %arg0, %c0_i32 : i32, i32
  }
}

</mosaic_0001>

<llo_original>
// kernel: tpu_custom_call.1
$region0: #{tpu_custom_call.1}
  #allocation0 [shape = 'u32[]', space=smem, size = 0x4, offset = 0x4, fixed_abs, tag = 'smem constant byte address 0x4 - core index']
  #allocation1 [shape = 'u32[72,128]{1,0:T(1,128)}', space=vmem, size = 0x9000, scoped, tag = 'internal scratch']
  #allocation2 [shape = 'f32[16,32]{1,0:T(8,128)}', space=vmem, size = 0x2000, scoped, tag = 'scratch operand']
  %s0 = inlined_call_operand.vmem [shape: f32[16,32], index: 0, kind: input, shape index: {}]
  %s1 = inlined_call_operand.vmem [shape: f32[1,32,256], index: 1, kind: input, shape index: {}]
  %s2 = inlined_call_operand.vmem [shape: f32[1,1,256], index: 2, kind: input, shape index: {}]
  %s3 = inlined_call_operand.vmem [shape: f32[128,32], index: 3, kind: input, shape index: {}]
  %s4 = inlined_call_operand.vmem [shape: f32[1,32], index: 4, kind: input, shape index: {}]
  %s5 = inlined_call_operand.hbm [shape: f32[16,32], index: 5, kind: output, shape index: {}]
  %s6 = sld [smem:[#allocation0]]
  $region38: #{tpu_custom_call.1} parent=0
    _
  %s8 = ssub.s32 1, %s6
  %s9 = scalar_select 0, %s8, %s6
  $region1: #{tpu_custom_call.1} parent=0
    #allocation3 [shape = 'u8[8192]{0}', space=vmem, size = 0x2000, scoped, tag = 'output window, operand 0, single buffered']
    #allocation4 [shape = 's32[1]{0}', space=sflag, size = 0x4, scoped, tag = 'scoped memory for tpu_custom_call.1']
    %10 = vsyncpa [#allocation4], 0
    // Predicated region
    $region2: #{tpu_custom_call.1} parent=1 // pred_check
      _
    $region3: #{tpu_custom_call.1} parent=1 // pred_check_branch
      %12 = sbr.rel (0) target = $region5
    $region4: #{tpu_custom_call.1} parent=1 // pred_region
      _
    $region5: #{tpu_custom_call.1} parent=1 // pred_fallthru
      _
    // Predicated region
    $region6: #{tpu_custom_call.1} parent=1 // pred_check
      _
    $region7: #{tpu_custom_call.1} parent=1 // pred_check_branch
      %14 = sbr.rel (0) target = $region9
    $region8: #{tpu_custom_call.1} parent=1 // pred_region
      _
    $region9: #{tpu_custom_call.1} parent=1 // pred_fallthru
      _
    // Predicated region
    $region10: #{tpu_custom_call.1} parent=1 // pred_check
      _
    $region11: #{tpu_custom_call.1} parent=1 // pred_check_branch
      %16 = sbr.rel (0) target = $region13
    $region12: #{tpu_custom_call.1} parent=1 // pred_region
      _
    $region13: #{tpu_custom_call.1} parent=1 // pred_fallthru
      _
    // Predicated region
    $region14: #{tpu_custom_call.1} parent=1 // pred_check
      _
    $region15: #{tpu_custom_call.1} parent=1 // pred_check_branch
      %18 = sbr.rel (0) target = $region17
    $region16: #{tpu_custom_call.1} parent=1 // pred_region
      _
    $region17: #{tpu_custom_call.1} parent=1 // pred_fallthru
      _
    // Predicated region
    $region18: #{tpu_custom_call.1} parent=1 // pred_check
      _
    $region19: #{tpu_custom_call.1} parent=1 // pred_check_branch
      %20 = sbr.rel (0) target = $region21
    $region20: #{tpu_custom_call.1} parent=1 // pred_region
      _
    $region21: #{tpu_custom_call.1} parent=1 // pred_fallthru
      _
    %p21 = scmp.eq.s32.totalorder 0, 0
    // Predicated region
    $region22: #{tpu_custom_call.1} parent=1 // pred_check
      %p22 = pneg %p21
    $region23: #{tpu_custom_call.1} parent=1 // pred_check_branch
      %24 = sbr.rel (%p22) target = $region25
    $region24: #{tpu_custom_call.1} parent=1 // pred_region
      %vm25 = vcmask 261120
      %26 = vst.msk [vmem:[#allocation2] sm:$0xff] %vm25, 0.0
      %27 = vst.msk [vmem:[#allocation2 + $0x8] sm:$0xff] %vm25, 0.0
    $region25: #{tpu_custom_call.1} parent=1 // pred_fallthru
      _
    %v28 = vld [vmem:[%s0] sm:$0xff]
    %v29 = vld [vmem:[%s0 + $0x8] sm:$0xff]
    %v30 = vld [vmem:[%s1] sm:$0xff]
    %v31 = vld [vmem:[%s1 + $0x8] sm:$0xff]
    %v32 = vld [vmem:[%s1 + $0x10] sm:$0xff]
    %v33 = vld [vmem:[%s1 + $0x18] sm:$0xff]
    %v34 = vld [vmem:[%s1 + $0x20] sm:$0xff]
    %v35 = vld [vmem:[%s1 + $0x28] sm:$0xff]
    %v36 = vld [vmem:[%s1 + $0x30] sm:$0xff]
    %v37 = vld [vmem:[%s1 + $0x38] sm:$0xff]
    %v38 = vld [vmem:[%s2] sm:$0x3]
    %v40 = vperm.slane %v38, 0
    %v41 = vperm.slane %v38, 1
    %vm44 = vcmask 261120
    %v46 = vsel %vm44, %v28, 0
    %v49 = vsel %vm44, %v29, 0
    %51 = vmatpush.msra.mxu0 0.0
    %52 = vmatpush.msra.mxu0 0.0
    %53 = vmatpush.msra.mxu0 0.0
    %54 = vmatpush.msra.mxu0 0.0
    %55 = vmatpush.msra.mxu0 0.0
    %56 = vmatpush.msra.mxu0 0.0
    %57 = vmatpush.msra.mxu0 0.0
    %58 = vmatpush.msra.mxu0 0.0
    %59 = vmatpush.msra.mxu0 0.0
    %60 = vmatpush.msra.mxu0 0.0
    %61 = vmatpush.msra.mxu0 0.0
    %62 = vmatpush.msra.mxu0 0.0
    %v63 = vand.u32 %v36, 4294901760
    %64 = vmatpush.msra.mxu0 %v63
    %v65 = vand.u32 %v34, 4294901760
    %66 = vmatpush.msra.mxu0 %v65
    %v67 = vand.u32 %v32, 4294901760
    %68 = vmatpush.msra.mxu0 %v67
    %v69 = vand.u32 %v30, 4294901760
    %70 = vmatpush.msra.mxu0 %v69
    %v71 = vand.u32 %v46, 4294901760
    %v72 = vsub.f32 %v46, %v71
    %v73 = vand.u32 %v72, 4294901760
    %v74 = vsub.f32 %v72, %v73
    %v75 = vand.u32 %v74, 4294901760
    %76 = vmatmul.f32.gmra.mxu0 %v75
    %v77 = vpop.f32.mrf.mxu0
    %v78 = vadd.f32 %v40, %v77
    %v79 = vand.u32 %v49, 4294901760
    %v80 = vsub.f32 %v49, %v79
    %v81 = vand.u32 %v80, 4294901760
    %v82 = vsub.f32 %v80, %v81
    %v83 = vand.u32 %v82, 4294901760
    %84 = vmatmul.f32.gmra.mxu0 %v83
    %v85 = vpop.f32.mrf.mxu0
    %v86 = vadd.f32 %v40, %v85
    %87 = vdwg.mxu0
    %88 = vmatpush.msra.mxu0 0.0
    %89 = vmatpush.msra.mxu0 0.0
    %90 = vmatpush.msra.mxu0 0.0
    %91 = vmatpush.msra.mxu0 0.0
    %92 = vmatpush.msra.mxu0 0.0
    %93 = vmatpush.msra.mxu0 0.0
    %94 = vmatpush.msra.mxu0 0.0
    %95 = vmatpush.msra.mxu0 0.0
    %96 = vmatpush.msra.mxu0 0.0
    %97 = vmatpush.msra.mxu0 0.0
    %98 = vmatpush.msra.mxu0 0.0
    %99 = vmatpush.msra.mxu0 0.0
    %v100 = vand.u32 %v36, 4294901760
    %v101 = vsub.f32 %v36, %v100
    %v102 = vand.u32 %v101, 4294901760
    %v103 = vsub.f32 %v101, %v102
    %v104 = vand.u32 %v103, 4294901760
    %105 = vmatpush.msra.mxu0 %v104
    %v106 = vand.u32 %v34, 4294901760
    %v107 = vsub.f32 %v34, %v106
    %v108 = vand.u32 %v107, 4294901760
    %v109 = vsub.f32 %v107, %v108
    %v110 = vand.u32 %v109, 4294901760
    %111 = vmatpush.msra.mxu0 %v110
    %v112 = vand.u32 %v32, 4294901760
    %v113 = vsub.f32 %v32, %v112
    %v114 = vand.u32 %v113, 4294901760
    %v115 = vsub.f32 %v113, %v114
    %v116 = vand.u32 %v115, 4294901760
    %117 = vmatpush.msra.mxu0 %v116
    %v118 = vand.u32 %v30, 4294901760
    %v119 = vsub.f32 %v30, %v118
    %v120 = vand.u32 %v119, 4294901760
    %v121 = vsub.f32 %v119, %v120
    %v122 = vand.u32 %v121, 4294901760
    %123 = vmatpush.msra.mxu0 %v122
    %v124 = vand.u32 %v46, 4294901760
    %125 = vmatmul.f32.gmra.mxu0 %v124
    %v126 = vpop.f32.mrf.mxu0
    %v127 = vadd.f32 %v78, %v126
    %v128 = vand.u32 %v49, 4294901760
    %129 = vmatmul.f32.gmra.mxu0 %v128
    %v130 = vpop.f32.mrf.mxu0
    %v131 = vadd.f32 %v86, %v130
    %132 = vdwg.mxu0
    %133 = vmatpush.msra.mxu0 0.0
    %134 = vmatpush.msra.mxu0 0.0
    %135 = vmatpush.msra.mxu0 0.0
    %136 = vmatpush.msra.mxu0 0.0
    %137 = vmatpush.msra.mxu0 0.0
    %138 = vmatpush.msra.mxu0 0.0
    %139 = vmatpush.msra.mxu0 0.0
    %140 = vmatpush.msra.mxu0 0.0
    %141 = vmatpush.msra.mxu0 0.0
    %142 = vmatpush.msra.mxu0 0.0
    %143 = vmatpush.msra.mxu0 0.0
    %144 = vmatpush.msra.mxu0 0.0
    %v145 = vand.u32 %v36, 4294901760
    %v146 = vsub.f32 %v36, %v145
    %147 = vmatpush.msra.mxu0 %v146
    %v148 = vand.u32 %v34, 4294901760
    %v149 = vsub.f32 %v34, %v148
    %150 = vmatpush.msra.mxu0 %v149
    %v151 = vand.u32 %v32, 4294901760
    %v152 = vsub.f32 %v32, %v151
    %153 = vmatpush.msra.mxu0 %v152
    %v154 = vand.u32 %v30, 4294901760
    %v155 = vsub.f32 %v30, %v154
    %156 = vmatpush.msra.mxu0 %v155
    %v157 = vand.u32 %v46, 4294901760
    %v158 = vsub.f32 %v46, %v157
    %159 = vmatmul.f32.gmra.mxu0 %v158
    %v160 = vpop.f32.mrf.mxu0
    %v161 = vadd.f32 %v127, %v160
    %v162 = vand.u32 %v49, 4294901760
    %v163 = vsub.f32 %v49, %v162
    %164 = vmatmul.f32.gmra.mxu0 %v163
    %v165 = vpop.f32.mrf.mxu0
    %v166 = vadd.f32 %v131, %v165
    %167 = vdwg.mxu0
    %168 = vmatpush.msra.mxu0 0.0
    %169 = vmatpush.msra.mxu0 0.0
    %170 = vmatpush.msra.mxu0 0.0
    %171 = vmatpush.msra.mxu0 0.0
    %172 = vmatpush.msra.mxu0 0.0
    %173 = vmatpush.msra.mxu0 0.0
    %174 = vmatpush.msra.mxu0 0.0
    %175 = vmatpush.msra.mxu0 0.0
    %176 = vmatpush.msra.mxu0 0.0
    %177 = vmatpush.msra.mxu0 0.0
    %178 = vmatpush.msra.mxu0 0.0
    %179 = vmatpush.msra.mxu0 0.0
    %v180 = vand.u32 %v36, 4294901760
    %181 = vmatpush.msra.mxu0 %v180
    %v182 = vand.u32 %v34, 4294901760
    %183 = vmatpush.msra.mxu0 %v182
    %v184 = vand.u32 %v32, 4294901760
    %185 = vmatpush.msra.mxu0 %v184
    %v186 = vand.u32 %v30, 4294901760
    %187 = vmatpush.msra.mxu0 %v186
    %v188 = vand.u32 %v46, 4294901760
    %v189 = vsub.f32 %v46, %v188
    %v190 = vand.u32 %v189, 4294901760
    %191 = vmatmul.f32.gmra.mxu0 %v190
    %v192 = vpop.f32.mrf.mxu0
    %v193 = vadd.f32 %v161, %v192
    %v194 = vand.u32 %v49, 4294901760
    %v195 = vsub.f32 %v49, %v194
    %v196 = vand.u32 %v195, 4294901760
    %197 = vmatmul.f32.gmra.mxu0 %v196
    %v198 = vpop.f32.mrf.mxu0
    %v199 = vadd.f32 %v166, %v198
    %200 = vdwg.mxu0
    %201 = vmatpush.msra.mxu0 0.0
    %202 = vmatpush.msra.mxu0 0.0
    %203 = vmatpush.msra.mxu0 0.0
    %204 = vmatpush.msra.mxu0 0.0
    %205 = vmatpush.msra.mxu0 0.0
    %206 = vmatpush.msra.mxu0 0.0
    %207 = vmatpush.msra.mxu0 0.0
    %208 = vmatpush.msra.mxu0 0.0
    %209 = vmatpush.msra.mxu0 0.0
    %210 = vmatpush.msra.mxu0 0.0
    %211 = vmatpush.msra.mxu0 0.0
    %212 = vmatpush.msra.mxu0 0.0
    %v213 = vand.u32 %v36, 4294901760
    %v214 = vsub.f32 %v36, %v213
    %v215 = vand.u32 %v214, 4294901760
    %216 = vmatpush.msra.mxu0 %v215
    %v217 = vand.u32 %v34, 4294901760
    %v218 = vsub.f32 %v34, %v217
    %v219 = vand.u32 %v218, 4294901760
    %220 = vmatpush.msra.mxu0 %v219
    %v221 = vand.u32 %v32, 4294901760
    %v222 = vsub.f32 %v32, %v221
    %v223 = vand.u32 %v222, 4294901760
    %224 = vmatpush.msra.mxu0 %v223
    %v225 = vand.u32 %v30, 4294901760
    %v226 = vsub.f32 %v30, %v225
    %v227 = vand.u32 %v226, 4294901760
    %228 = vmatpush.msra.mxu0 %v227
    %v229 = vand.u32 %v46, 4294901760
    %230 = vmatmul.f32.gmra.mxu0 %v229
    %v231 = vpop.f32.mrf.mxu0
    %v232 = vadd.f32 %v193, %v231
    %v233 = vand.u32 %v49, 4294901760
    %234 = vmatmul.f32.gmra.mxu0 %v233
    %v235 = vpop.f32.mrf.mxu0
    %v236 = vadd.f32 %v199, %v235
    %237 = vdwg.mxu0
    %238 = vmatpush.msra.mxu0 0.0
    %239 = vmatpush.msra.mxu0 0.0
    %240 = vmatpush.msra.mxu0 0.0
    %241 = vmatpush.msra.mxu0 0.0
    %242 = vmatpush.msra.mxu0 0.0
    %243 = vmatpush.msra.mxu0 0.0
    %244 = vmatpush.msra.mxu0 0.0
    %245 = vmatpush.msra.mxu0 0.0
    %246 = vmatpush.msra.mxu0 0.0
    %247 = vmatpush.msra.mxu0 0.0
    %248 = vmatpush.msra.mxu0 0.0
    %249 = vmatpush.msra.mxu0 0.0
    %v250 = vand.u32 %v36, 4294901760
    %251 = vmatpush.msra.mxu0 %v250
    %v252 = vand.u32 %v34, 4294901760
    %253 = vmatpush.msra.mxu0 %v252
    %v254 = vand.u32 %v32, 4294901760
    %255 = vmatpush.msra.mxu0 %v254
    %v256 = vand.u32 %v30, 4294901760
    %257 = vmatpush.msra.mxu0 %v256
    %v258 = vand.u32 %v46, 4294901760
    %259 = vmatmul.f32.gmra.mxu0 %v258
    %v260 = vpop.f32.mrf.mxu0
    %v261 = vadd.f32 %v232, %v260
    %v262 = vand.u32 %v49, 4294901760
    %263 = vmatmul.f32.gmra.mxu0 %v262
    %v264 = vpop.f32.mrf.mxu0
    %v265 = vadd.f32 %v236, %v264
    %266 = vdwg.mxu0
    %267 = vmatpush.msra.mxu0 0.0
    %268 = vmatpush.msra.mxu0 0.0
    %269 = vmatpush.msra.mxu0 0.0
    %270 = vmatpush.msra.mxu0 0.0
    %271 = vmatpush.msra.mxu0 0.0
    %272 = vmatpush.msra.mxu0 0.0
    %273 = vmatpush.msra.mxu0 0.0
    %274 = vmatpush.msra.mxu0 0.0
    %275 = vmatpush.msra.mxu0 0.0
    %276 = vmatpush.msra.mxu0 0.0
    %277 = vmatpush.msra.mxu0 0.0
    %278 = vmatpush.msra.mxu0 0.0
    %v279 = vand.u32 %v37, 4294901760
    %280 = vmatpush.msra.mxu0 %v279
    %v281 = vand.u32 %v35, 4294901760
    %282 = vmatpush.msra.mxu0 %v281
    %v283 = vand.u32 %v33, 4294901760
    %284 = vmatpush.msra.mxu0 %v283
    %v285 = vand.u32 %v31, 4294901760
    %286 = vmatpush.msra.mxu0 %v285
    %v287 = vand.u32 %v46, 4294901760
    %v288 = vsub.f32 %v46, %v287
    %v289 = vand.u32 %v288, 4294901760
    %v290 = vsub.f32 %v288, %v289
    %v291 = vand.u32 %v290, 4294901760
    %292 = vmatmul.f32.gmra.mxu0 %v291
    %v293 = vpop.f32.mrf.mxu0
    %v294 = vadd.f32 %v41, %v293
    %v295 = vand.u32 %v49, 4294901760
    %v296 = vsub.f32 %v49, %v295
    %v297 = vand.u32 %v296, 4294901760
    %v298 = vsub.f32 %v296, %v297
    %v299 = vand.u32 %v298, 4294901760
    %300 = vmatmul.f32.gmra.mxu0 %v299
    %v301 = vpop.f32.mrf.mxu0
    %v302 = vadd.f32 %v41, %v301
    %303 = vdwg.mxu0
    %304 = vmatpush.msra.mxu0 0.0
    %305 = vmatpush.msra.mxu0 0.0
    %306 = vmatpush.msra.mxu0 0.0
    %307 = vmatpush.msra.mxu0 0.0
    %308 = vmatpush.msra.mxu0 0.0
    %309 = vmatpush.msra.mxu0 0.0
    %310 = vmatpush.msra.mxu0 0.0
    %311 = vmatpush.msra.mxu0 0.0
    %312 = vmatpush.msra.mxu0 0.0
    %313 = vmatpush.msra.mxu0 0.0
    %314 = vmatpush.msra.mxu0 0.0
    %315 = vmatpush.msra.mxu0 0.0
    %v316 = vand.u32 %v37, 4294901760
    %v317 = vsub.f32 %v37, %v316
    %v318 = vand.u32 %v317, 4294901760
    %v319 = vsub.f32 %v317, %v318
    %v320 = vand.u32 %v319, 4294901760
    %321 = vmatpush.msra.mxu0 %v320
    %v322 = vand.u32 %v35, 4294901760
    %v323 = vsub.f32 %v35, %v322
    %v324 = vand.u32 %v323, 4294901760
    %v325 = vsub.f32 %v323, %v324
    %v326 = vand.u32 %v325, 4294901760
    %327 = vmatpush.msra.mxu0 %v326
    %v328 = vand.u32 %v33, 4294901760
    %v329 = vsub.f32 %v33, %v328
    %v330 = vand.u32 %v329, 4294901760
    %v331 = vsub.f32 %v329, %v330
    %v332 = vand.u32 %v331, 4294901760
    %333 = vmatpush.msra.mxu0 %v332
    %v334 = vand.u32 %v31, 4294901760
    %v335 = vsub.f32 %v31, %v334
    %v336 = vand.u32 %v335, 4294901760
    %v337 = vsub.f32 %v335, %v336
    %v338 = vand.u32 %v337, 4294901760
    %339 = vmatpush.msra.mxu0 %v338
    %v340 = vand.u32 %v46, 4294901760
    %341 = vmatmul.f32.gmra.mxu0 %v340
    %v342 = vpop.f32.mrf.mxu0
    %v343 = vadd.f32 %v294, %v342
    %v344 = vand.u32 %v49, 4294901760
    %345 = vmatmul.f32.gmra.mxu0 %v344
    %v346 = vpop.f32.mrf.mxu0
    %v347 = vadd.f32 %v302, %v346
    %348 = vdwg.mxu0
    %349 = vmatpush.msra.mxu0 0.0
    %350 = vmatpush.msra.mxu0 0.0
    %351 = vmatpush.msra.mxu0 0.0
    %352 = vmatpush.msra.mxu0 0.0
    %353 = vmatpush.msra.mxu0 0.0
    %354 = vmatpush.msra.mxu0 0.0
    %355 = vmatpush.msra.mxu0 0.0
    %356 = vmatpush.msra.mxu0 0.0
    %357 = vmatpush.msra.mxu0 0.0
    %358 = vmatpush.msra.mxu0 0.0
    %359 = vmatpush.msra.mxu0 0.0
    %360 = vmatpush.msra.mxu0 0.0
    %v361 = vand.u32 %v37, 4294901760
    %v362 = vsub.f32 %v37, %v361
    %363 = vmatpush.msra.mxu0 %v362
    %v364 = vand.u32 %v35, 4294901760
    %v365 = vsub.f32 %v35, %v364
    %366 = vmatpush.msra.mxu0 %v365
    %v367 = vand.u32 %v33, 4294901760
    %v368 = vsub.f32 %v33, %v367
    %369 = vmatpush.msra.mxu0 %v368
    %v370 = vand.u32 %v31, 4294901760
    %v371 = vsub.f32 %v31, %v370
    %372 = vmatpush.msra.mxu0 %v371
    %v373 = vand.u32 %v46, 4294901760
    %v374 = vsub.f32 %v46, %v373
    %375 = vmatmul.f32.gmra.mxu0 %v374
    %v376 = vpop.f32.mrf.mxu0
    %v377 = vadd.f32 %v343, %v376
    %v378 = vand.u32 %v49, 4294901760
    %v379 = vsub.f32 %v49, %v378
    %380 = vmatmul.f32.gmra.mxu0 %v379
    %v381 = vpop.f32.mrf.mxu0
    %v382 = vadd.f32 %v347, %v381
    %383 = vdwg.mxu0
    %384 = vmatpush.msra.mxu0 0.0
    %385 = vmatpush.msra.mxu0 0.0
    %386 = vmatpush.msra.mxu0 0.0
    %387 = vmatpush.msra.mxu0 0.0
    %388 = vmatpush.msra.mxu0 0.0
    %389 = vmatpush.msra.mxu0 0.0
    %390 = vmatpush.msra.mxu0 0.0
    %391 = vmatpush.msra.mxu0 0.0
    %392 = vmatpush.msra.mxu0 0.0
    %393 = vmatpush.msra.mxu0 0.0
    %394 = vmatpush.msra.mxu0 0.0
    %395 = vmatpush.msra.mxu0 0.0
    %v396 = vand.u32 %v37, 4294901760
    %397 = vmatpush.msra.mxu0 %v396
    %v398 = vand.u32 %v35, 4294901760
    %399 = vmatpush.msra.mxu0 %v398
    %v400 = vand.u32 %v33, 4294901760
    %401 = vmatpush.msra.mxu0 %v400
    %v402 = vand.u32 %v31, 4294901760
    %403 = vmatpush.msra.mxu0 %v402
    %v404 = vand.u32 %v46, 4294901760
    %v405 = vsub.f32 %v46, %v404
    %v406 = vand.u32 %v405, 4294901760
    %407 = vmatmul.f32.gmra.mxu0 %v406
    %v408 = vpop.f32.mrf.mxu0
    %v409 = vadd.f32 %v377, %v408
    %v410 = vand.u32 %v49, 4294901760
    %v411 = vsub.f32 %v49, %v410
    %v412 = vand.u32 %v411, 4294901760
    %413 = vmatmul.f32.gmra.mxu0 %v412
    %v414 = vpop.f32.mrf.mxu0
    %v415 = vadd.f32 %v382, %v414
    %416 = vdwg.mxu0
    %417 = vmatpush.msra.mxu0 0.0
    %418 = vmatpush.msra.mxu0 0.0
    %419 = vmatpush.msra.mxu0 0.0
    %420 = vmatpush.msra.mxu0 0.0
    %421 = vmatpush.msra.mxu0 0.0
    %422 = vmatpush.msra.mxu0 0.0
    %423 = vmatpush.msra.mxu0 0.0
    %424 = vmatpush.msra.mxu0 0.0
    %425 = vmatpush.msra.mxu0 0.0
    %426 = vmatpush.msra.mxu0 0.0
    %427 = vmatpush.msra.mxu0 0.0
    %428 = vmatpush.msra.mxu0 0.0
    %v429 = vand.u32 %v37, 4294901760
    %v430 = vsub.f32 %v37, %v429
    %v431 = vand.u32 %v430, 4294901760
    %432 = vmatpush.msra.mxu0 %v431
    %v433 = vand.u32 %v35, 4294901760
    %v434 = vsub.f32 %v35, %v433
    %v435 = vand.u32 %v434, 4294901760
    %436 = vmatpush.msra.mxu0 %v435
    %v437 = vand.u32 %v33, 4294901760
    %v438 = vsub.f32 %v33, %v437
    %v439 = vand.u32 %v438, 4294901760
    %440 = vmatpush.msra.mxu0 %v439
    %v441 = vand.u32 %v31, 4294901760
    %v442 = vsub.f32 %v31, %v441
    %v443 = vand.u32 %v442, 4294901760
    %444 = vmatpush.msra.mxu0 %v443
    %v445 = vand.u32 %v46, 4294901760
    %446 = vmatmul.f32.gmra.mxu0 %v445
    %v447 = vpop.f32.mrf.mxu0
    %v448 = vadd.f32 %v409, %v447
    %v449 = vand.u32 %v49, 4294901760
    %450 = vmatmul.f32.gmra.mxu0 %v449
    %v451 = vpop.f32.mrf.mxu0
    %v452 = vadd.f32 %v415, %v451
    %453 = vdwg.mxu0
    %454 = vmatpush.msra.mxu0 0.0
    %455 = vmatpush.msra.mxu0 0.0
    %456 = vmatpush.msra.mxu0 0.0
    %457 = vmatpush.msra.mxu0 0.0
    %458 = vmatpush.msra.mxu0 0.0
    %459 = vmatpush.msra.mxu0 0.0
    %460 = vmatpush.msra.mxu0 0.0
    %461 = vmatpush.msra.mxu0 0.0
    %462 = vmatpush.msra.mxu0 0.0
    %463 = vmatpush.msra.mxu0 0.0
    %464 = vmatpush.msra.mxu0 0.0
    %465 = vmatpush.msra.mxu0 0.0
    %v466 = vand.u32 %v37, 4294901760
    %467 = vmatpush.msra.mxu0 %v466
    %v468 = vand.u32 %v35, 4294901760
    %469 = vmatpush.msra.mxu0 %v468
    %v470 = vand.u32 %v33, 4294901760
    %471 = vmatpush.msra.mxu0 %v470
    %v472 = vand.u32 %v31, 4294901760
    %473 = vmatpush.msra.mxu0 %v472
    %v474 = vand.u32 %v46, 4294901760
    %475 = vmatmul.f32.gmra.mxu0 %v474
    %v476 = vpop.f32.mrf.mxu0
    %v477 = vadd.f32 %v448, %v476
    %v478 = vand.u32 %v49, 4294901760
    %479 = vmatmul.f32.gmra.mxu0 %v478
    %v480 = vpop.f32.mrf.mxu0
    %v481 = vadd.f32 %v452, %v480
    %482 = vdwg.mxu0
    %v483 = vxor.u32 %v261, 2147483648
    %v484 = vxor.u32 %v265, 2147483648
    %v485 = vmul.f32 %v483, 1.442695
    %v486 = vpow.pop %v485
    %v487 = vmul.f32 %v484, 1.442695
    %v488 = vpow.pop %v487
    %v489 = vadd.f32 %v486, 1.0
    %v490 = vadd.f32 %v488, 1.0
    %v491 = vrcp.pop %v489
    %v492 = vmul.f32 %v489, %v491
    %v493 = vsub.f32 1.0, %v492
    %v494 = vmul.f32 %v491, %v493
    %v495 = vadd.f32 %v491, %v494
    %vm496 = vweird.f32 %v489
    %vm497 = vweird.f32 %v491
    %vm498 = vmor %vm496, %vm497
    %v499 = vsel %vm498, %v491, %v495
    %v500 = vand.u32 2147483647, %v489
    %vm501 = vcmp.eq.f32.partialorder %v500, 8.507059e+37
    %v502 = vand.u32 %v489, 2147483648
    %v503 = vor.u32 1.1754944e-38, %v502
    %v504 = vsel %vm501, %v503, %v499
    %v505 = vmul.f32 1.0, %v504
    %v506 = vrcp.pop %v490
    %v507 = vmul.f32 %v490, %v506
    %v508 = vsub.f32 1.0, %v507
    %v509 = vmul.f32 %v506, %v508
    %v510 = vadd.f32 %v506, %v509
    %vm511 = vweird.f32 %v490
    %vm512 = vweird.f32 %v506
    %vm513 = vmor %vm511, %vm512
    %v514 = vsel %vm513, %v506, %v510
    %v515 = vand.u32 2147483647, %v490
    %vm516 = vcmp.eq.f32.partialorder %v515, 8.507059e+37
    %v517 = vand.u32 %v490, 2147483648
    %v518 = vor.u32 1.1754944e-38, %v517
    %v519 = vsel %vm516, %v518, %v514
    %v520 = vmul.f32 1.0, %v519
    %v521 = vmul.f32 %v261, %v505
    %v522 = vmul.f32 %v265, %v520
    %v523 = vmul.f32 %v521, %v477
    %v524 = vmul.f32 %v522, %v481
    %v525 = vld [vmem:[#allocation2] sm:$0xff]
    %v526 = vld [vmem:[#allocation2 + $0x8] sm:$0xff]
    %v527 = vld [vmem:[%s3] sm:$0xff]
    %v528 = vld [vmem:[%s3 + $0x8] sm:$0xff]
    %v529 = vld [vmem:[%s3 + $0x10] sm:$0xff]
    %v530 = vld [vmem:[%s3 + $0x18] sm:$0xff]
    %v531 = vld [vmem:[%s3 + $0x20] sm:$0xff]
    %v532 = vld [vmem:[%s3 + $0x28] sm:$0xff]
    %v533 = vld [vmem:[%s3 + $0x30] sm:$0xff]
    %v534 = vld [vmem:[%s3 + $0x38] sm:$0xff]
    %v535 = vld [vmem:[%s3 + $0x40] sm:$0xff]
    %v536 = vld [vmem:[%s3 + $0x48] sm:$0xff]
    %v537 = vld [vmem:[%s3 + $0x50] sm:$0xff]
    %v538 = vld [vmem:[%s3 + $0x58] sm:$0xff]
    %v539 = vld [vmem:[%s3 + $0x60] sm:$0xff]
    %v540 = vld [vmem:[%s3 + $0x68] sm:$0xff]
    %v541 = vld [vmem:[%s3 + $0x70] sm:$0xff]
    %v542 = vld [vmem:[%s3 + $0x78] sm:$0xff]
    %v543 = vand.u32 %v542, 4294901760
    %544 = vmatpush.msra.mxu0 %v543
    %v545 = vand.u32 %v541, 4294901760
    %546 = vmatpush.msra.mxu0 %v545
    %v547 = vand.u32 %v540, 4294901760
    %548 = vmatpush.msra.mxu0 %v547
    %v549 = vand.u32 %v539, 4294901760
    %550 = vmatpush.msra.mxu0 %v549
    %v551 = vand.u32 %v538, 4294901760
    %552 = vmatpush.msra.mxu0 %v551
    %v553 = vand.u32 %v537, 4294901760
    %554 = vmatpush.msra.mxu0 %v553
    %v555 = vand.u32 %v536, 4294901760
    %556 = vmatpush.msra.mxu0 %v555
    %v557 = vand.u32 %v535, 4294901760
    %558 = vmatpush.msra.mxu0 %v557
    %v559 = vand.u32 %v534, 4294901760
    %560 = vmatpush.msra.mxu0 %v559
    %v561 = vand.u32 %v533, 4294901760
    %562 = vmatpush.msra.mxu0 %v561
    %v563 = vand.u32 %v532, 4294901760
    %564 = vmatpush.msra.mxu0 %v563
    %v565 = vand.u32 %v531, 4294901760
    %566 = vmatpush.msra.mxu0 %v565
    %v567 = vand.u32 %v530, 4294901760
    %568 = vmatpush.msra.mxu0 %v567
    %v569 = vand.u32 %v529, 4294901760
    %570 = vmatpush.msra.mxu0 %v569
    %v571 = vand.u32 %v528, 4294901760
    %572 = vmatpush.msra.mxu0 %v571
    %v573 = vand.u32 %v527, 4294901760
    %574 = vmatpush.msra.mxu0 %v573
    %v575 = vand.u32 %v523, 4294901760
    %v576 = vsub.f32 %v523, %v575
    %v577 = vand.u32 %v576, 4294901760
    %v578 = vsub.f32 %v576, %v577
    %v579 = vand.u32 %v578, 4294901760
    %580 = vmatmul.f32.gmra.mxu0 %v579
    %v581 = vpop.f32.mrf.mxu0
    %v582 = vadd.f32 0.0, %v581
    %v583 = vand.u32 %v524, 4294901760
    %v584 = vsub.f32 %v524, %v583
    %v585 = vand.u32 %v584, 4294901760
    %v586 = vsub.f32 %v584, %v585
    %v587 = vand.u32 %v586, 4294901760
    %588 = vmatmul.f32.gmra.mxu0 %v587
    %v589 = vpop.f32.mrf.mxu0
    %v590 = vadd.f32 0.0, %v589
    %591 = vdwg.mxu0
    %v592 = vand.u32 %v542, 4294901760
    %v593 = vsub.f32 %v542, %v592
    %v594 = vand.u32 %v593, 4294901760
    %v595 = vsub.f32 %v593, %v594
    %v596 = vand.u32 %v595, 4294901760
    %597 = vmatpush.msra.mxu0 %v596
    %v598 = vand.u32 %v541, 4294901760
    %v599 = vsub.f32 %v541, %v598
    %v600 = vand.u32 %v599, 4294901760
    %v601 = vsub.f32 %v599, %v600
    %v602 = vand.u32 %v601, 4294901760
    %603 = vmatpush.msra.mxu0 %v602
    %v604 = vand.u32 %v540, 4294901760
    %v605 = vsub.f32 %v540, %v604
    %v606 = vand.u32 %v605, 4294901760
    %v607 = vsub.f32 %v605, %v606
    %v608 = vand.u32 %v607, 4294901760
    %609 = vmatpush.msra.mxu0 %v608
    %v610 = vand.u32 %v539, 4294901760
    %v611 = vsub.f32 %v539, %v610
    %v612 = vand.u32 %v611, 4294901760
    %v613 = vsub.f32 %v611, %v612
    %v614 = vand.u32 %v613, 4294901760
    %615 = vmatpush.msra.mxu0 %v614
    %v616 = vand.u32 %v538, 4294901760
    %v617 = vsub.f32 %v538, %v616
    %v618 = vand.u32 %v617, 4294901760
    %v619 = vsub.f32 %v617, %v618
    %v620 = vand.u32 %v619, 4294901760
    %621 = vmatpush.msra.mxu0 %v620
    %v622 = vand.u32 %v537, 4294901760
    %v623 = vsub.f32 %v537, %v622
    %v624 = vand.u32 %v623, 4294901760
    %v625 = vsub.f32 %v623, %v624
    %v626 = vand.u32 %v625, 4294901760
    %627 = vmatpush.msra.mxu0 %v626
    %v628 = vand.u32 %v536, 4294901760
    %v629 = vsub.f32 %v536, %v628
    %v630 = vand.u32 %v629, 4294901760
    %v631 = vsub.f32 %v629, %v630
    %v632 = vand.u32 %v631, 4294901760
    %633 = vmatpush.msra.mxu0 %v632
    %v634 = vand.u32 %v535, 4294901760
    %v635 = vsub.f32 %v535, %v634
    %v636 = vand.u32 %v635, 4294901760
    %v637 = vsub.f32 %v635, %v636
    %v638 = vand.u32 %v637, 4294901760
    %639 = vmatpush.msra.mxu0 %v638
    %v640 = vand.u32 %v534, 4294901760
    %v641 = vsub.f32 %v534, %v640
    %v642 = vand.u32 %v641, 4294901760
    %v643 = vsub.f32 %v641, %v642
    %v644 = vand.u32 %v643, 4294901760
    %645 = vmatpush.msra.mxu0 %v644
    %v646 = vand.u32 %v533, 4294901760
    %v647 = vsub.f32 %v533, %v646
    %v648 = vand.u32 %v647, 4294901760
    %v649 = vsub.f32 %v647, %v648
    %v650 = vand.u32 %v649, 4294901760
    %651 = vmatpush.msra.mxu0 %v650
    %v652 = vand.u32 %v532, 4294901760
    %v653 = vsub.f32 %v532, %v652
    %v654 = vand.u32 %v653, 4294901760
    %v655 = vsub.f32 %v653, %v654
    %v656 = vand.u32 %v655, 4294901760
    %657 = vmatpush.msra.mxu0 %v656
    %v658 = vand.u32 %v531, 4294901760
    %v659 = vsub.f32 %v531, %v658
    %v660 = vand.u32 %v659, 4294901760
    %v661 = vsub.f32 %v659, %v660
    %v662 = vand.u32 %v661, 4294901760
    %663 = vmatpush.msra.mxu0 %v662
    %v664 = vand.u32 %v530, 4294901760
    %v665 = vsub.f32 %v530, %v664
    %v666 = vand.u32 %v665, 4294901760
    %v667 = vsub.f32 %v665, %v666
    %v668 = vand.u32 %v667, 4294901760
    %669 = vmatpush.msra.mxu0 %v668
    %v670 = vand.u32 %v529, 4294901760
    %v671 = vsub.f32 %v529, %v670
    %v672 = vand.u32 %v671, 4294901760
    %v673 = vsub.f32 %v671, %v672
    %v674 = vand.u32 %v673, 4294901760
    %675 = vmatpush.msra.mxu0 %v674
    %v676 = vand.u32 %v528, 4294901760
    %v677 = vsub.f32 %v528, %v676
    %v678 = vand.u32 %v677, 4294901760
    %v679 = vsub.f32 %v677, %v678
    %v680 = vand.u32 %v679, 4294901760
    %681 = vmatpush.msra.mxu0 %v680
    %v682 = vand.u32 %v527, 4294901760
    %v683 = vsub.f32 %v527, %v682
    %v684 = vand.u32 %v683, 4294901760
    %v685 = vsub.f32 %v683, %v684
    %v686 = vand.u32 %v685, 4294901760
    %687 = vmatpush.msra.mxu0 %v686
    %v688 = vand.u32 %v523, 4294901760
    %689 = vmatmul.f32.gmra.mxu0 %v688
    %v690 = vpop.f32.mrf.mxu0
    %v691 = vadd.f32 %v582, %v690
    %v692 = vand.u32 %v524, 4294901760
    %693 = vmatmul.f32.gmra.mxu0 %v692
    %v694 = vpop.f32.mrf.mxu0
    %v695 = vadd.f32 %v590, %v694
    %696 = vdwg.mxu0
    %v697 = vand.u32 %v542, 4294901760
    %v698 = vsub.f32 %v542, %v697
    %699 = vmatpush.msra.mxu0 %v698
    %v700 = vand.u32 %v541, 4294901760
    %v701 = vsub.f32 %v541, %v700
    %702 = vmatpush.msra.mxu0 %v701
    %v703 = vand.u32 %v540, 4294901760
    %v704 = vsub.f32 %v540, %v703
    %705 = vmatpush.msra.mxu0 %v704
    %v706 = vand.u32 %v539, 4294901760
    %v707 = vsub.f32 %v539, %v706
    %708 = vmatpush.msra.mxu0 %v707
    %v709 = vand.u32 %v538, 4294901760
    %v710 = vsub.f32 %v538, %v709
    %711 = vmatpush.msra.mxu0 %v710
    %v712 = vand.u32 %v537, 4294901760
    %v713 = vsub.f32 %v537, %v712
    %714 = vmatpush.msra.mxu0 %v713
    %v715 = vand.u32 %v536, 4294901760
    %v716 = vsub.f32 %v536, %v715
    %717 = vmatpush.msra.mxu0 %v716
    %v718 = vand.u32 %v535, 4294901760
    %v719 = vsub.f32 %v535, %v718
    %720 = vmatpush.msra.mxu0 %v719
    %v721 = vand.u32 %v534, 4294901760
    %v722 = vsub.f32 %v534, %v721
    %723 = vmatpush.msra.mxu0 %v722
    %v724 = vand.u32 %v533, 4294901760
    %v725 = vsub.f32 %v533, %v724
    %726 = vmatpush.msra.mxu0 %v725
    %v727 = vand.u32 %v532, 4294901760
    %v728 = vsub.f32 %v532, %v727
    %729 = vmatpush.msra.mxu0 %v728
    %v730 = vand.u32 %v531, 4294901760
    %v731 = vsub.f32 %v531, %v730
    %732 = vmatpush.msra.mxu0 %v731
    %v733 = vand.u32 %v530, 4294901760
    %v734 = vsub.f32 %v530, %v733
    %735 = vmatpush.msra.mxu0 %v734
    %v736 = vand.u32 %v529, 4294901760
    %v737 = vsub.f32 %v529, %v736
    %738 = vmatpush.msra.mxu0 %v737
    %v739 = vand.u32 %v528, 4294901760
    %v740 = vsub.f32 %v528, %v739
    %741 = vmatpush.msra.mxu0 %v740
    %v742 = vand.u32 %v527, 4294901760
    %v743 = vsub.f32 %v527, %v742
    %744 = vmatpush.msra.mxu0 %v743
    %v745 = vand.u32 %v523, 4294901760
    %v746 = vsub.f32 %v523, %v745
    %747 = vmatmul.f32.gmra.mxu0 %v746
    %v748 = vpop.f32.mrf.mxu0
    %v749 = vadd.f32 %v691, %v748
    %v750 = vand.u32 %v524, 4294901760
    %v751 = vsub.f32 %v524, %v750
    %752 = vmatmul.f32.gmra.mxu0 %v751
    %v753 = vpop.f32.mrf.mxu0
    %v754 = vadd.f32 %v695, %v753
    %755 = vdwg.mxu0
    %v756 = vand.u32 %v542, 4294901760
    %757 = vmatpush.msra.mxu0 %v756
    %v758 = vand.u32 %v541, 4294901760
    %759 = vmatpush.msra.mxu0 %v758
    %v760 = vand.u32 %v540, 4294901760
    %761 = vmatpush.msra.mxu0 %v760
    %v762 = vand.u32 %v539, 4294901760
    %763 = vmatpush.msra.mxu0 %v762
    %v764 = vand.u32 %v538, 4294901760
    %765 = vmatpush.msra.mxu0 %v764
    %v766 = vand.u32 %v537, 4294901760
    %767 = vmatpush.msra.mxu0 %v766
    %v768 = vand.u32 %v536, 4294901760
    %769 = vmatpush.msra.mxu0 %v768
    %v770 = vand.u32 %v535, 4294901760
    %771 = vmatpush.msra.mxu0 %v770
    %v772 = vand.u32 %v534, 4294901760
    %773 = vmatpush.msra.mxu0 %v772
    %v774 = vand.u32 %v533, 4294901760
    %775 = vmatpush.msra.mxu0 %v774
    %v776 = vand.u32 %v532, 4294901760
    %777 = vmatpush.msra.mxu0 %v776
    %v778 = vand.u32 %v531, 4294901760
    %779 = vmatpush.msra.mxu0 %v778
    %v780 = vand.u32 %v530, 4294901760
    %781 = vmatpush.msra.mxu0 %v780
    %v782 = vand.u32 %v529, 4294901760
    %783 = vmatpush.msra.mxu0 %v782
    %v784 = vand.u32 %v528, 4294901760
    %785 = vmatpush.msra.mxu0 %v784
    %v786 = vand.u32 %v527, 4294901760
    %787 = vmatpush.msra.mxu0 %v786
    %v788 = vand.u32 %v523, 4294901760
    %v789 = vsub.f32 %v523, %v788
    %v790 = vand.u32 %v789, 4294901760
    %791 = vmatmul.f32.gmra.mxu0 %v790
    %v792 = vpop.f32.mrf.mxu0
    %v793 = vadd.f32 %v749, %v792
    %v794 = vand.u32 %v524, 4294901760
    %v795 = vsub.f32 %v524, %v794
    %v796 = vand.u32 %v795, 4294901760
    %797 = vmatmul.f32.gmra.mxu0 %v796
    %v798 = vpop.f32.mrf.mxu0
    %v799 = vadd.f32 %v754, %v798
    %800 = vdwg.mxu0
    %v801 = vand.u32 %v542, 4294901760
    %v802 = vsub.f32 %v542, %v801
    %v803 = vand.u32 %v802, 4294901760
    %804 = vmatpush.msra.mxu0 %v803
    %v805 = vand.u32 %v541, 4294901760
    %v806 = vsub.f32 %v541, %v805
    %v807 = vand.u32 %v806, 4294901760
    %808 = vmatpush.msra.mxu0 %v807
    %v809 = vand.u32 %v540, 4294901760
    %v810 = vsub.f32 %v540, %v809
    %v811 = vand.u32 %v810, 4294901760
    %812 = vmatpush.msra.mxu0 %v811
    %v813 = vand.u32 %v539, 4294901760
    %v814 = vsub.f32 %v539, %v813
    %v815 = vand.u32 %v814, 4294901760
    %816 = vmatpush.msra.mxu0 %v815
    %v817 = vand.u32 %v538, 4294901760
    %v818 = vsub.f32 %v538, %v817
    %v819 = vand.u32 %v818, 4294901760
    %820 = vmatpush.msra.mxu0 %v819
    %v821 = vand.u32 %v537, 4294901760
    %v822 = vsub.f32 %v537, %v821
    %v823 = vand.u32 %v822, 4294901760
    %824 = vmatpush.msra.mxu0 %v823
    %v825 = vand.u32 %v536, 4294901760
    %v826 = vsub.f32 %v536, %v825
    %v827 = vand.u32 %v826, 4294901760
    %828 = vmatpush.msra.mxu0 %v827
    %v829 = vand.u32 %v535, 4294901760
    %v830 = vsub.f32 %v535, %v829
    %v831 = vand.u32 %v830, 4294901760
    %832 = vmatpush.msra.mxu0 %v831
    %v833 = vand.u32 %v534, 4294901760
    %v834 = vsub.f32 %v534, %v833
    %v835 = vand.u32 %v834, 4294901760
    %836 = vmatpush.msra.mxu0 %v835
    %v837 = vand.u32 %v533, 4294901760
    %v838 = vsub.f32 %v533, %v837
    %v839 = vand.u32 %v838, 4294901760
    %840 = vmatpush.msra.mxu0 %v839
    %v841 = vand.u32 %v532, 4294901760
    %v842 = vsub.f32 %v532, %v841
    %v843 = vand.u32 %v842, 4294901760
    %844 = vmatpush.msra.mxu0 %v843
    %v845 = vand.u32 %v531, 4294901760
    %v846 = vsub.f32 %v531, %v845
    %v847 = vand.u32 %v846, 4294901760
    %848 = vmatpush.msra.mxu0 %v847
    %v849 = vand.u32 %v530, 4294901760
    %v850 = vsub.f32 %v530, %v849
    %v851 = vand.u32 %v850, 4294901760
    %852 = vmatpush.msra.mxu0 %v851
    %v853 = vand.u32 %v529, 4294901760
    %v854 = vsub.f32 %v529, %v853
    %v855 = vand.u32 %v854, 4294901760
    %856 = vmatpush.msra.mxu0 %v855
    %v857 = vand.u32 %v528, 4294901760
    %v858 = vsub.f32 %v528, %v857
    %v859 = vand.u32 %v858, 4294901760
    %860 = vmatpush.msra.mxu0 %v859
    %v861 = vand.u32 %v527, 4294901760
    %v862 = vsub.f32 %v527, %v861
    %v863 = vand.u32 %v862, 4294901760
    %864 = vmatpush.msra.mxu0 %v863
    %v865 = vand.u32 %v523, 4294901760
    %866 = vmatmul.f32.gmra.mxu0 %v865
    %v867 = vpop.f32.mrf.mxu0
    %v868 = vadd.f32 %v793, %v867
    %v869 = vand.u32 %v524, 4294901760
    %870 = vmatmul.f32.gmra.mxu0 %v869
    %v871 = vpop.f32.mrf.mxu0
    %v872 = vadd.f32 %v799, %v871
    %873 = vdwg.mxu0
    %v874 = vand.u32 %v542, 4294901760
    %875 = vmatpush.msra.mxu0 %v874
    %v876 = vand.u32 %v541, 4294901760
    %877 = vmatpush.msra.mxu0 %v876
    %v878 = vand.u32 %v540, 4294901760
    %879 = vmatpush.msra.mxu0 %v878
    %v880 = vand.u32 %v539, 4294901760
    %881 = vmatpush.msra.mxu0 %v880
    %v882 = vand.u32 %v538, 4294901760
    %883 = vmatpush.msra.mxu0 %v882
    %v884 = vand.u32 %v537, 4294901760
    %885 = vmatpush.msra.mxu0 %v884
    %v886 = vand.u32 %v536, 4294901760
    %887 = vmatpush.msra.mxu0 %v886
    %v888 = vand.u32 %v535, 4294901760
    %889 = vmatpush.msra.mxu0 %v888
    %v890 = vand.u32 %v534, 4294901760
    %891 = vmatpush.msra.mxu0 %v890
    %v892 = vand.u32 %v533, 4294901760
    %893 = vmatpush.msra.mxu0 %v892
    %v894 = vand.u32 %v532, 4294901760
    %895 = vmatpush.msra.mxu0 %v894
    %v896 = vand.u32 %v531, 4294901760
    %897 = vmatpush.msra.mxu0 %v896
    %v898 = vand.u32 %v530, 4294901760
    %899 = vmatpush.msra.mxu0 %v898
    %v900 = vand.u32 %v529, 4294901760
    %901 = vmatpush.msra.mxu0 %v900
    %v902 = vand.u32 %v528, 4294901760
    %903 = vmatpush.msra.mxu0 %v902
    %v904 = vand.u32 %v527, 4294901760
    %905 = vmatpush.msra.mxu0 %v904
    %v906 = vand.u32 %v523, 4294901760
    %907 = vmatmul.f32.gmra.mxu0 %v906
    %v908 = vpop.f32.mrf.mxu0
    %v909 = vadd.f32 %v868, %v908
    %v910 = vand.u32 %v524, 4294901760
    %911 = vmatmul.f32.gmra.mxu0 %v910
    %v912 = vpop.f32.mrf.mxu0
    %v913 = vadd.f32 %v872, %v912
    %914 = vdwg.mxu0
    %v915 = vadd.f32 %v525, %v909
    %v916 = vadd.f32 %v526, %v913
    %917 = vst.msk [vmem:[#allocation2] sm:$0xff] %vm44, %v915
    %918 = vst.msk [vmem:[#allocation2 + $0x8] sm:$0xff] %vm44, %v916
    // Predicated region
    $region26: #{tpu_custom_call.1} parent=1 // pred_check
      %p919 = pneg %p21
    $region27: #{tpu_custom_call.1} parent=1 // pred_check_branch
      %921 = sbr.rel (%p919) target = $region29
    $region28: #{tpu_custom_call.1} parent=1 // pred_region
      %v922 = vld [vmem:[#allocation2] sm:$0xff]
      %v923 = vld [vmem:[#allocation2 + $0x8] sm:$0xff]
      %v924 = vld [vmem:[%s4] sm:$0x1]
      %v926 = vperm.slane %v924, 0
      %v928 = vadd.f32 %v922, %v926
      %v929 = vadd.f32 %v923, %v926
      %930 = vst.msk [vmem:[#allocation3] sm:$0xff] %vm44, %v928
      %931 = vst.msk [vmem:[#allocation3 + $0x8] sm:$0xff] %vm44, %v929
    $region29: #{tpu_custom_call.1} parent=1 // pred_fallthru
      _
    // Predicated region
    $region30: #{tpu_custom_call.1} parent=1 // pred_check
      _
    $region31: #{tpu_custom_call.1} parent=1 // pred_check_branch
      %933 = sbr.rel (0) target = $region33
    $region32: #{tpu_custom_call.1} parent=1 // pred_region
      %935 = vsyncadd [#allocation4], 0
      %s936 = sshll.u32 [#allocation3], 4
      %s937 = int_to_ptr.vmem [resolvable:$true] %s936
      %s938 = sshll.u32 %s5, 4
      %s939 = int_to_ptr.hbm [resolvable:$true] %s938
      %944 = dma.vmem_to_hbm [thread:$0]  %s937, 256, %s939, [#allocation4], 128, 128, 8
    $region33: #{tpu_custom_call.1} parent=1 // pred_fallthru
      _
    // Predicated region
    $region34: #{tpu_custom_call.1} parent=1 // pred_check
      _
    $region35: #{tpu_custom_call.1} parent=1 // pred_check_branch
      %946 = sbr.rel (0) target = $region37
    $region36: #{tpu_custom_call.1} parent=1 // pred_region
      %948 = dma.done [#allocation4], 256
    $region37: #{tpu_custom_call.1} parent=1 // pred_fallthru
      _
    %949 = vsyncpa [#allocation4], 1

</llo_original>
